<compile_context>
chip_gen: v5e
topology: v5e:2x2
jax: 0.10.0
libtpu: 0.0.40
codegen_flags: <defaults>
</compile_context>

<pallas_src>
import math

import jax
import jax.numpy as jnp
from jax.experimental import pallas as pl
from jax.experimental.pallas import tpu as pltpu


def _make_random_layer_kernel(n_inputs: int, scale: float):
    """Fused kernel: n matmuls (MXU, f32 accum) + scaled elementwise product (VPU)."""

    def kernel(*refs):
        # refs = (x_0, ..., x_{n-1}, r_0, ..., r_{n-1}, out)
        x_refs = refs[:n_inputs]
        r_refs = refs[n_inputs:2 * n_inputs]
        o_ref = refs[2 * n_inputs]

        # First product carries the 1 / output_dim**(1/n) scale (f32 VPU mul).
        acc = jnp.dot(x_refs[0][...], r_refs[0][...],
                      preferred_element_type=jnp.float32) * scale
        # Remaining products multiplied in elementwise, all in f32.
        for i in range(1, n_inputs):
            acc = acc * jnp.dot(x_refs[i][...], r_refs[i][...],
                                preferred_element_type=jnp.float32)
        o_ref[...] = acc.astype(o_ref.dtype)

    return kernel


def _vmem_capacity_bytes(default: int = 64 * 1024 * 1024) -> int:
    """Physical VMEM of the local TPU; conservative 64 MiB (v7x) fallback."""
    try:
        info = pltpu.get_tpu_info()
        cap = int(getattr(info, "vmem_capacity_bytes", default))
        if cap > 0:
            return cap
    except Exception:
        pass
    return default


def _round_up8(v: int) -> int:
    return -(-v // 8) * 8


def _shrink_tile_b(tb: int) -> int:
    return max(8, ((tb // 2) // 8) * 8)


def random_layer_forward(input_list, random_matrices, output_dim, *,
                         compute_dtype=jnp.bfloat16,
                         out_dtype=jnp.float32,
                         max_tile_b: int = 1024,
                         vmem_budget_bytes=None):
    """Pallas implementation of RandomLayer.forward.

    input_list:        list of (B, d_i) arrays
    random_matrices:   list of (d_i, output_dim) arrays
    Returns (B, output_dim) array in `out_dtype`.
    """
    n = len(input_list)
    assert n == len(random_matrices) and n >= 1
    B = int(input_list[0].shape[0])
    N = int(output_dim)
    d_list = [int(x.shape[1]) for x in input_list]
    assert all(int(x.shape[0]) == B for x in input_list)
    assert all(int(r.shape[0]) == d and int(r.shape[1]) == N
               for r, d in zip(random_matrices, d_list))

    scale = 1.0 / math.pow(float(N), 1.0 / n)
    kernel = _make_random_layer_kernel(n, scale)

    in_bytes = jnp.dtype(compute_dtype).itemsize
    out_bytes = jnp.dtype(out_dtype).itemsize

    # --- VMEM budget: derived from the chip, not a hard-coded 36/48 MiB ---
    vmem_cap = _vmem_capacity_bytes()
    if vmem_budget_bytes is None:
        vmem_budget_bytes = int(vmem_cap * 0.60)   # blocks + temps budget
    vmem_limit_cap = int(vmem_cap * 0.80)          # scoped-VMEM ceiling

    def vmem_estimate(tb: int, tn: int) -> int:
        est = 2 * tb * tn * out_bytes                       # output, 2-deep
        est += 2 * sum(tb * d * in_bytes for d in d_list)   # x blocks, 2-deep
        est += 2 * sum(d * tn * in_bytes for d in d_list)   # weight blocks
        # Live f32 temporaries of the Hadamard chain (acc + popped dot result,
        # conservatively n of them) that the compiler keeps in VMEM/vregs.
        est += max(2, n) * tb * tn * 4
        return est

    # --- batch tile: multiple of 8 (or == B); >= 2 grid steps when B >= 16 so
    #     v7x's second TensorCore gets a "parallel" tile to work on.
    if B < 16:
        desired_b = B
    else:
        desired_b = min(max_tile_b, _round_up8(-(-B // 2)))

    def try_fit(tn: int):
        tb = desired_b
        while True:
            if vmem_estimate(tb, tn) <= vmem_budget_bytes:
                return tb
            if tb <= 8:
                return None
            tb = _shrink_tile_b(tb)

    # 1) Preferred: resident weights, full-width lane-dense output (tile_n = N).
    tile_n = N
    tile_b = try_fit(N)
    if tile_b is None:
        # 2) Fallback: column tiling with lane-aligned tiles dividing N.
        cands = [c for c in (8192, 4096, 2048, 1024, 512, 256, 128)
                 if N % c == 0 and c < N]
        if not cands:
            cands = [N]
        chosen = None
        for tn in cands:
            tb = try_fit(tn)
            if tb is not None:
                chosen = (tb, tn)
                break
        if chosen is None:                 # best effort: smallest legal block
            chosen = (8, cands[-1])
        tile_b, tile_n = chosen
    n_tiles_n = -(-N // tile_n)

    # --- pad batch so the grid tiles evenly ---
    B_pad = -(-B // tile_b) * tile_b
    n_tiles_b = B_pad // tile_b

    xs = []
    for x in input_list:
        x = x.astype(compute_dtype)
        if B_pad != B:
            x = jnp.pad(x, ((0, B_pad - B), (0, 0)))
        xs.append(x)
    rs = [r.astype(compute_dtype) for r in random_matrices]

    # --- grid / BlockSpecs ---
    if n_tiles_n == 1:
        grid = (n_tiles_b,)
        x_specs = [pl.BlockSpec((tile_b, d), lambda i: (i, 0)) for d in d_list]
        r_specs = [pl.BlockSpec((d, tile_n), lambda i: (0, 0)) for d in d_list]
        out_spec = pl.BlockSpec((tile_b, tile_n), lambda i: (i, 0))
        dim_sem = ("parallel",)
    else:
        # Column tiles on the OUTER axis: each weight block is fetched once per
        # column tile while batch tiles stream on the inner axis.
        grid = (n_tiles_n, n_tiles_b)
        x_specs = [pl.BlockSpec((tile_b, d), lambda j, i: (i, 0))
                   for d in d_list]
        r_specs = [pl.BlockSpec((d, tile_n), lambda j, i: (0, j))
                   for d in d_list]
        out_spec = pl.BlockSpec((tile_b, tile_n), lambda j, i: (i, j))
        dim_sem = ("parallel", "parallel")

    est = vmem_estimate(tile_b, tile_n)
    vmem_limit = int(min(max(48 * 1024 * 1024, 2 * est), vmem_limit_cap))

    grid_spec = pltpu.PrefetchScalarGridSpec(
        num_scalar_prefetch=0,
        grid=grid,
        in_specs=x_specs + r_specs,
        out_specs=out_spec,
    )

    out = pl.pallas_call(
        kernel,
        out_shape=jax.ShapeDtypeStruct((B_pad, N), out_dtype),
        grid_spec=grid_spec,
        compiler_params=pltpu.CompilerParams(
            dimension_semantics=dim_sem,
            vmem_limit_bytes=vmem_limit),
    )(*xs, *rs)

    if B_pad != B:
        out = out[:B]
    return out


def random_layer_reference(input_list, random_matrices, output_dim):
    """Pure-JAX reference mirroring the PyTorch forward."""
    n = len(input_list)
    prods = [x @ r for x, r in zip(input_list, random_matrices)]
    out = prods[0] / math.pow(float(output_dim), 1.0 / n)
    for p in prods[1:]:
        out = out * p
    return out


if __name__ == "__main__":
    # RandomLayer(input_dim_list=[32, 16], output_dim=256), batch = 8.
    input_dim_list = [32, 16]
    output_dim = 256
    batch = 8

    key = jax.random.PRNGKey(0)
    keys = jax.random.split(key, 2 * len(input_dim_list))

    # Deterministic "torch.randn"-style parameters (synthetic weights).
    random_matrices = [
        jax.random.normal(keys[i], (d, output_dim), dtype=jnp.float32)
        for i, d in enumerate(input_dim_list)
    ]
    # Example inputs.
    input_list = [
        jax.random.normal(keys[len(input_dim_list) + i], (batch, d),
                          dtype=jnp.float32)
        for i, d in enumerate(input_dim_list)
    ]

    ref = random_layer_reference(input_list, random_matrices, output_dim)

    # Main (performance) path: bf16 MXU operands, f32 accumulation, f32 output.
    out = random_layer_forward(input_list, random_matrices, output_dim,
                               compute_dtype=jnp.bfloat16,
                               out_dtype=jnp.float32)
    out = jax.block_until_ready(out)
    assert out.shape == (batch, output_dim) and out.dtype == jnp.float32
    rel_err = jnp.max(jnp.abs(out - ref)) / (jnp.max(jnp.abs(ref)) + 1e-6)
    assert float(rel_err) < 5e-2, f"bf16 path rel_err={float(rel_err)}"

    # Exact-semantics check: same kernel with f32 operands, tight tolerance.
    out_f32 = random_layer_forward(input_list, random_matrices, output_dim,
                                   compute_dtype=jnp.float32,
                                   out_dtype=jnp.float32)
    out_f32 = jax.block_until_ready(out_f32)
    assert jnp.allclose(out_f32, ref, rtol=1e-4, atol=1e-4)

    # Optional bf16 output path (halves HBM writeback); loose tolerance.
    out_bf16 = random_layer_forward(input_list, random_matrices, output_dim,
                                    compute_dtype=jnp.bfloat16,
                                    out_dtype=jnp.bfloat16)
    out_bf16 = jax.block_until_ready(out_bf16)
    assert out_bf16.dtype == jnp.bfloat16
    rel_err_bf16 = (jnp.max(jnp.abs(out_bf16.astype(jnp.float32) - ref))
                    / (jnp.max(jnp.abs(ref)) + 1e-6))
    assert float(rel_err_bf16) < 1e-1, f"bf16-out rel_err={float(rel_err_bf16)}"

    print("KERNEL_OK")
</pallas_src>

<mosaic_0001>
module attributes {stable_mosaic.version = 11 : i64} {
  func.func @kernel(%arg0: i32, %arg1: memref<8x32xbf16, #tpu.memory_space<vmem>>, %arg2: memref<8x16xbf16, #tpu.memory_space<vmem>>, %arg3: memref<32x256xbf16, #tpu.memory_space<vmem>>, %arg4: memref<16x256xbf16, #tpu.memory_space<vmem>>, %arg5: memref<8x256xf32, #tpu.memory_space<vmem>>) attributes {dimension_semantics = [#tpu.dimension_semantics<parallel>], iteration_bounds = array<i64: 1>, scalar_prefetch = 0 : i64, scratch_operands = 0 : i64, tpu.core_type = #tpu.core_type<tc>, window_params = [{transform_indices = @transform_0, window_bounds = array<i64: 8, 32>}, {transform_indices = @transform_1, window_bounds = array<i64: 8, 16>}, {pipeline_mode = #tpu.pipeline_mode<synchronous>, transform_indices = @transform_2, window_bounds = array<i64: 32, 256>}, {pipeline_mode = #tpu.pipeline_mode<synchronous>, transform_indices = @transform_3, window_bounds = array<i64: 16, 256>}, {transform_indices = @transform_4, window_bounds = array<i64: 8, 256>}]} {
    %c0 = arith.constant 0 : index
    %c0_0 = arith.constant 0 : index
    %0 = vector.load %arg1[%c0, %c0_0] : memref<8x32xbf16, #tpu.memory_space<vmem>>, vector<8x32xbf16>
    %c0_1 = arith.constant 0 : index
    %c0_2 = arith.constant 0 : index
    %1 = vector.load %arg3[%c0_1, %c0_2] : memref<32x256xbf16, #tpu.memory_space<vmem>>, vector<32x256xbf16>
    %cst = arith.constant dense<0.000000e+00> : vector<8x256xf32>
    %2 = tpu.matmul %0, %1, %cst {dimension_numbers = #tpu.dot_dimension_numbers<[1], [0], [0], [1], [0, 0, 1, 1], [], []>} : vector<8x32xbf16>, vector<32x256xbf16>, vector<8x256xf32> -> vector<8x256xf32>
    %cst_3 = arith.constant 6.250000e-02 : f32
    %3 = vector.broadcast %cst_3 : f32 to vector<8x256xf32>
    %4 = arith.mulf %2, %3 : vector<8x256xf32>
    %c0_4 = arith.constant 0 : index
    %c0_5 = arith.constant 0 : index
    %5 = vector.load %arg2[%c0_4, %c0_5] : memref<8x16xbf16, #tpu.memory_space<vmem>>, vector<8x16xbf16>
    %c0_6 = arith.constant 0 : index
    %c0_7 = arith.constant 0 : index
    %6 = vector.load %arg4[%c0_6, %c0_7] : memref<16x256xbf16, #tpu.memory_space<vmem>>, vector<16x256xbf16>
    %cst_8 = arith.constant dense<0.000000e+00> : vector<8x256xf32>
    %7 = tpu.matmul %5, %6, %cst_8 {dimension_numbers = #tpu.dot_dimension_numbers<[1], [0], [0], [1], [0, 0, 1, 1], [], []>} : vector<8x16xbf16>, vector<16x256xbf16>, vector<8x256xf32> -> vector<8x256xf32>
    %8 = arith.mulf %4, %7 : vector<8x256xf32>
    %c0_9 = arith.constant 0 : index
    %c0_10 = arith.constant 0 : index
    %9 = vector.load %arg5[%c0_9, %c0_10] : memref<8x256xf32, #tpu.memory_space<vmem>>, vector<8x256xf32>
    tpu.vector_store %arg5[%c0_9, %c0_10], %8 {strides = array<i32>} : memref<8x256xf32, #tpu.memory_space<vmem>>, vector<8x256xf32>,
    return
  }
  func.func @transform_0(%arg0: i32) -> (i32, i32) {
    %c0_i32 = arith.constant 0 : i32
    %c0_i32_0 = arith.constant 0 : i32
    return %arg0, %c0_i32 : i32, i32
  }
  func.func @transform_1(%arg0: i32) -> (i32, i32) {
    %c0_i32 = arith.constant 0 : i32
    %c0_i32_0 = arith.constant 0 : i32
    return %arg0, %c0_i32 : i32, i32
  }
  func.func @transform_2(%arg0: i32) -> (i32, i32) {
    %c0_i32 = arith.constant 0 : i32
    %c0_i32_0 = arith.constant 0 : i32
    %c0_i32_1 = arith.constant 0 : i32
    return %c0_i32, %c0_i32_0 : i32, i32
  }
  func.func @transform_3(%arg0: i32) -> (i32, i32) {
    %c0_i32 = arith.constant 0 : i32
    %c0_i32_0 = arith.constant 0 : i32
    %c0_i32_1 = arith.constant 0 : i32
    return %c0_i32, %c0_i32_0 : i32, i32
  }
  func.func @transform_4(%arg0: i32) -> (i32, i32) {
    %c0_i32 = arith.constant 0 : i32
    %c0_i32_0 = arith.constant 0 : i32
    return %arg0, %c0_i32 : i32, i32
  }
}

</mosaic_0001>

<llo_original>
// kernel: tpu_custom_call.1
$region0: #{tpu_custom_call.1}
  #allocation0 [shape = 'u32[]', space=smem, size = 0x4, offset = 0x4, fixed_abs, tag = 'smem constant byte address 0x4 - core index']
  #allocation1 [shape = 'u32[72,128]{1,0:T(1,128)}', space=vmem, size = 0x9000, scoped, tag = 'internal scratch']
  %s0 = inlined_call_operand.hbm [shape: bf16[8,32], index: 0, kind: input, shape index: {}]
  %s1 = inlined_call_operand.hbm [shape: bf16[8,16], index: 1, kind: input, shape index: {}]
  %s2 = inlined_call_operand.hbm [shape: bf16[32,256], index: 2, kind: input, shape index: {}]
  %s3 = inlined_call_operand.hbm [shape: bf16[16,256], index: 3, kind: input, shape index: {}]
  %s4 = inlined_call_operand.hbm [shape: f32[8,256], index: 4, kind: output, shape index: {}]
  %s5 = sld [smem:[#allocation0]]
  $region42: #{tpu_custom_call.1} parent=0
    _
  %s7 = ssub.s32 1, %s5
  %s8 = scalar_select 0, %s7, %s5
  $region1: #{tpu_custom_call.1} parent=0
    #allocation2 [shape = 'u8[2048]{0}', space=vmem, size = 0x800, scoped, tag = 'input window, operand 0, single buffered']
    #allocation3 [shape = 's32[1]{0}', space=sflag, size = 0x4, scoped, tag = 'scoped memory for tpu_custom_call.1']
    #allocation4 [shape = 's32[1]{0}', space=sflag, size = 0x4, scoped, tag = 'scoped memory for tpu_custom_call.1']
    #allocation5 [shape = 'u8[2048]{0}', space=vmem, size = 0x800, scoped, tag = 'input window, operand 1, single buffered']
    #allocation6 [shape = 's32[1]{0}', space=sflag, size = 0x4, scoped, tag = 'scoped memory for tpu_custom_call.1']
    #allocation7 [shape = 'u8[16384]{0}', space=vmem, size = 0x4000, scoped, tag = 'input window, operand 2, single buffered']
    #allocation8 [shape = 'u8[8192]{0}', space=vmem, size = 0x2000, scoped, tag = 'input window, operand 3, single buffered']
    #allocation9 [shape = 's32[1]{0}', space=sflag, size = 0x4, scoped, tag = 'scoped memory for tpu_custom_call.1']
    #allocation10 [shape = 'u8[8192]{0}', space=vmem, size = 0x2000, scoped, tag = 'output window, operand 0, single buffered']
    %9 = vsyncpa [#allocation3], 0
    %10 = vsyncpa [#allocation6], 0
    %11 = vsyncpa [#allocation9], 0
    %12 = vsyncpa [#allocation4], 0
    // Predicated region
    $region2: #{tpu_custom_call.1} parent=1 // pred_check
      _
    $region3: #{tpu_custom_call.1} parent=1 // pred_check_branch
      %14 = sbr.rel (0) target = $region5
    $region4: #{tpu_custom_call.1} parent=1 // pred_region
      %16 = vsyncadd [#allocation3], 0
      %s18 = sshll.u32 %s0, 4
      %s19 = int_to_ptr.hbm [resolvable:$true] %s18
      %s20 = sshll.u32 [#allocation2], 4
      %s21 = int_to_ptr.vmem [resolvable:$true] %s20
      %23 = dma.hbm_to_vmem [thread:$0]  %s19, 64, %s21, [#allocation3]
    $region5: #{tpu_custom_call.1} parent=1 // pred_fallthru
      _
    // Predicated region
    $region6: #{tpu_custom_call.1} parent=1 // pred_check
      _
    $region7: #{tpu_custom_call.1} parent=1 // pred_check_branch
      %25 = sbr.rel (0) target = $region9
    $region8: #{tpu_custom_call.1} parent=1 // pred_region
      %27 = vsyncadd [#allocation6], 0
      %s29 = sshll.u32 %s1, 4
      %s30 = int_to_ptr.hbm [resolvable:$true] %s29
      %s31 = sshll.u32 [#allocation5], 4
      %s32 = int_to_ptr.vmem [resolvable:$true] %s31
      %34 = dma.hbm_to_vmem [thread:$0]  %s30, 64, %s32, [#allocation6]
    $region9: #{tpu_custom_call.1} parent=1 // pred_fallthru
      _
    // Predicated region
    $region10: #{tpu_custom_call.1} parent=1 // pred_check
      _
    $region11: #{tpu_custom_call.1} parent=1 // pred_check_branch
      %36 = sbr.rel (0) target = $region13
    $region12: #{tpu_custom_call.1} parent=1 // pred_region
      %38 = vsyncadd [#allocation6], 0
      %s39 = sshll.u32 %s2, 4
      %s40 = int_to_ptr.hbm [resolvable:$true] %s39
      %s41 = sshll.u32 [#allocation7], 4
      %s42 = int_to_ptr.vmem [resolvable:$true] %s41
      %47 = dma.hbm_to_vmem [thread:$0]  %s40, 512, %s42, [#allocation6], 128, 128, 8
    $region13: #{tpu_custom_call.1} parent=1 // pred_fallthru
      _
    // Predicated region
    $region14: #{tpu_custom_call.1} parent=1 // pred_check
      _
    $region15: #{tpu_custom_call.1} parent=1 // pred_check_branch
      %49 = sbr.rel (0) target = $region17
    $region16: #{tpu_custom_call.1} parent=1 // pred_region
      %51 = vsyncadd [#allocation9], 0
      %s52 = sshll.u32 %s3, 4
      %s53 = int_to_ptr.hbm [resolvable:$true] %s52
      %s54 = sshll.u32 [#allocation8], 4
      %s55 = int_to_ptr.vmem [resolvable:$true] %s54
      %60 = dma.hbm_to_vmem [thread:$0]  %s53, 256, %s55, [#allocation9], 128, 128, 8
    $region17: #{tpu_custom_call.1} parent=1 // pred_fallthru
      _
    // Predicated region
    $region18: #{tpu_custom_call.1} parent=1 // pred_check
      _
    $region19: #{tpu_custom_call.1} parent=1 // pred_check_branch
      %62 = sbr.rel (0) target = $region21
    $region20: #{tpu_custom_call.1} parent=1 // pred_region
      %64 = dma.done [#allocation3], 64
    $region21: #{tpu_custom_call.1} parent=1 // pred_fallthru
      _
    // Predicated region
    $region22: #{tpu_custom_call.1} parent=1 // pred_check
      _
    $region23: #{tpu_custom_call.1} parent=1 // pred_check_branch
      %66 = sbr.rel (0) target = $region25
    $region24: #{tpu_custom_call.1} parent=1 // pred_region
      %68 = dma.done [#allocation6], 64
    $region25: #{tpu_custom_call.1} parent=1 // pred_fallthru
      _
    // Predicated region
    $region26: #{tpu_custom_call.1} parent=1 // pred_check
      _
    $region27: #{tpu_custom_call.1} parent=1 // pred_check_branch
      %70 = sbr.rel (0) target = $region29
    $region28: #{tpu_custom_call.1} parent=1 // pred_region
      %72 = dma.done [#allocation6], 512
    $region29: #{tpu_custom_call.1} parent=1 // pred_fallthru
      _
    // Predicated region
    $region30: #{tpu_custom_call.1} parent=1 // pred_check
      _
    $region31: #{tpu_custom_call.1} parent=1 // pred_check_branch
      %74 = sbr.rel (0) target = $region33
    $region32: #{tpu_custom_call.1} parent=1 // pred_region
      %76 = dma.done [#allocation9], 256
    $region33: #{tpu_custom_call.1} parent=1 // pred_fallthru
      _
    %v78 = vld [vmem:[#allocation2] sm:$0xf]
    %v79 = vld [vmem:[#allocation7] sm:$0xff]
    %v80 = vld [vmem:[#allocation7 + $0x8] sm:$0xff]
    %v81 = vld [vmem:[#allocation7 + $0x10] sm:$0xff]
    %v82 = vld [vmem:[#allocation7 + $0x18] sm:$0xff]
    %v87 = vunpack.c.l.b16 %v79
    %v88 = vunpack.c.h.b16 %v79
    %v89 = vunpack.c.l.b16 %v80
    %v90 = vunpack.c.h.b16 %v80
    %v91 = vunpack.c.l.b16 %v81
    %v92 = vunpack.c.h.b16 %v81
    %v93 = vunpack.c.l.b16 %v82
    %v94 = vunpack.c.h.b16 %v82
    %v95 = vpack.c.b16 %v89, %v87
    %v96 = vpack.c.b16 %v90, %v88
    %v97 = vpack.c.b16 %v93, %v91
    %v98 = vpack.c.b16 %v94, %v92
    %vm103 = vcmask 261120
    %v105 = vsel %vm103, %v78, 0
    %107 = vmatpush.bf16.msra.mxu0 0
    %108 = vmatpush.bf16.msra.mxu0 0
    %109 = vmatpush.bf16.msra.mxu0 0
    %110 = vmatpush.bf16.msra.mxu0 0
    %111 = vmatpush.bf16.msra.mxu0 0
    %112 = vmatpush.bf16.msra.mxu0 0
    %113 = vmatpush.bf16.msra.mxu0 %v97
    %114 = vmatpush.bf16.msra.mxu0 %v95
    %115 = vmatmul.bf16.gmra.mxu0 %v105
    %v116 = vpop.f32.mrf.mxu0
    %v117 = vadd.f32 0.0, %v116
    %v118 = vpop.f32.mrf.mxu0
    %119 = vdwg.mxu0
    %120 = vmatpush.bf16.msra.mxu0 0
    %121 = vmatpush.bf16.msra.mxu0 0
    %122 = vmatpush.bf16.msra.mxu0 0
    %123 = vmatpush.bf16.msra.mxu0 0
    %124 = vmatpush.bf16.msra.mxu0 0
    %125 = vmatpush.bf16.msra.mxu0 0
    %126 = vmatpush.bf16.msra.mxu0 %v98
    %127 = vmatpush.bf16.msra.mxu0 %v96
    %128 = vmatmul.bf16.gmra.mxu0 %v105
    %v129 = vpop.f32.mrf.mxu0
    %v130 = vadd.f32 0.0, %v129
    %v131 = vpop.f32.mrf.mxu0
    %132 = vdwg.mxu0
    %v133 = vmul.f32 %v117, 0.0625
    %v134 = vmul.f32 %v130, 0.0625
    %v135 = vld [vmem:[#allocation5] sm:$0xf]
    %v136 = vld [vmem:[#allocation8] sm:$0xff]
    %v137 = vld [vmem:[#allocation8 + $0x8] sm:$0xff]
    %v140 = vunpack.c.l.b16 %v136
    %v141 = vunpack.c.h.b16 %v136
    %v142 = vunpack.c.l.b16 %v137
    %v143 = vunpack.c.h.b16 %v137
    %v144 = vpack.c.b16 %v142, %v140
    %v145 = vpack.c.b16 %v143, %v141
    %vm148 = vcmask 130048
    %v150 = vsel %vm148, %v135, 0
    %152 = vmatpush.bf16.msra.mxu0 0
    %153 = vmatpush.bf16.msra.mxu0 0
    %154 = vmatpush.bf16.msra.mxu0 0
    %155 = vmatpush.bf16.msra.mxu0 0
    %156 = vmatpush.bf16.msra.mxu0 0
    %157 = vmatpush.bf16.msra.mxu0 0
    %158 = vmatpush.bf16.msra.mxu0 0
    %159 = vmatpush.bf16.msra.mxu0 %v144
    %160 = vmatmul.bf16.gmra.mxu0 %v150
    %v161 = vpop.f32.mrf.mxu0
    %v162 = vadd.f32 0.0, %v161
    %v163 = vpop.f32.mrf.mxu0
    %164 = vdwg.mxu0
    %165 = vmatpush.bf16.msra.mxu0 0
    %166 = vmatpush.bf16.msra.mxu0 0
    %167 = vmatpush.bf16.msra.mxu0 0
    %168 = vmatpush.bf16.msra.mxu0 0
    %169 = vmatpush.bf16.msra.mxu0 0
    %170 = vmatpush.bf16.msra.mxu0 0
    %171 = vmatpush.bf16.msra.mxu0 0
    %172 = vmatpush.bf16.msra.mxu0 %v145
    %173 = vmatmul.bf16.gmra.mxu0 %v150
    %v174 = vpop.f32.mrf.mxu0
    %v175 = vadd.f32 0.0, %v174
    %v176 = vpop.f32.mrf.mxu0
    %177 = vdwg.mxu0
    %v178 = vmul.f32 %v133, %v162
    %v179 = vmul.f32 %v134, %v175
    %180 = vst [vmem:[#allocation10] sm:$0xff] %v178
    %181 = vst [vmem:[#allocation10 + $0x8] sm:$0xff] %v179
    // Predicated region
    $region34: #{tpu_custom_call.1} parent=1 // pred_check
      _
    $region35: #{tpu_custom_call.1} parent=1 // pred_check_branch
      %183 = sbr.rel (0) target = $region37
    $region36: #{tpu_custom_call.1} parent=1 // pred_region
      %185 = vsyncadd [#allocation4], 0
      %s187 = sshll.u32 [#allocation10], 4
      %s188 = int_to_ptr.vmem [resolvable:$true] %s187
      %s189 = sshll.u32 %s4, 4
      %s190 = int_to_ptr.hbm [resolvable:$true] %s189
      %192 = dma.vmem_to_hbm [thread:$0]  %s188, 256, %s190, [#allocation4]
    $region37: #{tpu_custom_call.1} parent=1 // pred_fallthru
      _
    // Predicated region
    $region38: #{tpu_custom_call.1} parent=1 // pred_check
      _
    $region39: #{tpu_custom_call.1} parent=1 // pred_check_branch
      %194 = sbr.rel (0) target = $region41
    $region40: #{tpu_custom_call.1} parent=1 // pred_region
      %196 = dma.done [#allocation4], 256
    $region41: #{tpu_custom_call.1} parent=1 // pred_fallthru
      _
    %197 = vsyncpa [#allocation3], 1
    %198 = vsyncpa [#allocation6], 1
    %199 = vsyncpa [#allocation9], 1
    %200 = vsyncpa [#allocation4], 1

</llo_original>
